<compile_context>
chip_gen: v7x
topology: tpu7x:2x2x1
jax: 0.10.0
libtpu: 0.0.40
codegen_flags: <defaults>
</compile_context>

<pallas_src>
import jax
import jax.numpy as jnp
from jax import lax
from jax.experimental import pallas as pl
from jax.experimental.pallas import tpu as pltpu


def _round_up(a: int, m: int) -> int:
    return -(-a // m) * m


def _choose_batch_tiling(B: int):
    """Pick (TB, B_pad): large tiles to amortize per-step overhead, but >=2
    grid steps for bigger batches so v7x can shard the batch over its 2 TCs."""
    SUB = 16          # bf16 sublane packing
    TB_MAX = 1024
    B16 = _round_up(max(B, 1), SUB)
    if B16 <= 2 * SUB:
        n_steps = 1                      # too small to split usefully
    else:
        n_steps = max(2, -(-B16 // TB_MAX))
    TB = _round_up(-(-B16 // n_steps), SUB)
    B_pad = _round_up(B16, TB)
    return TB, B_pad


def _pack_params(params, in_features: int):
    """Pack weights into one bf16 slab (row-stacked) and biases into one f32 slab.

    Layer widths are padded to multiples of 128 and chained (layer i's padded
    output width == layer i+1's padded input width) with zero padding, so every
    in-kernel matmul / slice is lane-dense.
    """
    n_layers = len(params)
    outs = [w.shape[1] for w, _ in params]
    pad_out = [_round_up(d, 128) for d in outs]
    pad_in = [in_features] + pad_out[:-1]
    max_w = max(pad_out)                        # slab column width (512 here)

    layer_specs = []
    blocks = []
    roff = 0
    for i, (w, _) in enumerate(params):
        din, dout = w.shape
        K = pad_in[i]                           # contraction width used in-kernel
        N = pad_out[i]                          # padded output width
        rows = _round_up(K, 16)                 # keep row offsets bf16-tile aligned
        blk = jnp.zeros((rows, max_w), jnp.bfloat16)
        blk = blk.at[:din, :dout].set(w.astype(jnp.bfloat16))
        blocks.append(blk)
        layer_specs.append((roff, K, N))
        roff += rows
    w_pack = jnp.concatenate(blocks, axis=0)    # (rows, 512) bf16

    b_rows = _round_up(n_layers, 8)
    b_pack = jnp.zeros((b_rows, max_w), jnp.float32)
    for i, (_, b) in enumerate(params):
        b_pack = b_pack.at[i, : b.shape[-1]].set(b.reshape(-1))

    return w_pack, b_pack, tuple(layer_specs), pad_out[-1]


def _make_kernel(layer_specs, num_classes: int):
    n_layers = len(layer_specs)

    def kernel(x_ref, w_ref, b_ref, o_ref):
        h = x_ref[...]                                   # bf16 (TB, in_features)
        logits = None
        for i, (roff, K, N) in enumerate(layer_specs):
            w = w_ref[roff:roff + K, 0:N]                # bf16 (K, N), static slice
            b = b_ref[i:i + 1, 0:N]                      # f32  (1, N)
            y = jnp.dot(h, w, preferred_element_type=jnp.float32) + b
            if i < n_layers - 1:
                # ReLU in f32 (v5e VPU has no bf16), store activation as bf16.
                # Dropout layers are identity in eval mode.
                h = jnp.maximum(y, 0.0).astype(jnp.bfloat16)
            else:
                logits = y                               # f32 (TB, 128)

        # Numerically stable softmax over the real classes only: padded lanes
        # are masked to a large negative so they exp to 0 in the denominator.
        col = lax.broadcasted_iota(jnp.int32, logits.shape, 1)
        logits = jnp.where(col < num_classes, logits, -1e30)
        m = jnp.max(logits, axis=1, keepdims=True)
        e = jnp.exp(logits - m)
        denom = jnp.sum(e, axis=1, keepdims=True)
        o_ref[...] = (e / denom).astype(o_ref.dtype)     # exact divide: rows sum to 1

    return kernel


def very_advanced_ffnn(x, params):
    """params: list of (W, b) with W shaped (in, out) f32, b shaped (1, out) f32."""
    B, in_features = x.shape
    num_classes = params[-1][0].shape[1]

    w_pack, b_pack, layer_specs, out_pad = _pack_params(params, in_features)
    TB, B_pad = _choose_batch_tiling(B)

    xb = x.astype(jnp.bfloat16)
    if B_pad != B:
        xb = jnp.pad(xb, ((0, B_pad - B), (0, 0)))

    kernel = _make_kernel(layer_specs, num_classes)

    flops = 2 * B_pad * sum(K * N for _, K, N in layer_specs)
    bytes_accessed = (xb.size * 2 + int(w_pack.size) * 2 + int(b_pack.size) * 4
                      + B_pad * out_pad * 4)
    cost = pl.CostEstimate(flops=int(flops),
                           transcendentals=int(B_pad * out_pad),
                           bytes_accessed=int(bytes_accessed))

    out = pl.pallas_call(
        kernel,
        out_shape=jax.ShapeDtypeStruct((B_pad, out_pad), jnp.float32),
        grid=(B_pad // TB,),
        in_specs=[
            pl.BlockSpec((TB, in_features), lambda i: (i, 0)),   # x: tiled over batch
            pl.BlockSpec(w_pack.shape, lambda i: (0, 0)),        # weights: VMEM-resident
            pl.BlockSpec(b_pack.shape, lambda i: (0, 0)),        # biases:  VMEM-resident
        ],
        out_specs=pl.BlockSpec((TB, out_pad), lambda i: (i, 0)), # lane-dense output
        compiler_params=pltpu.CompilerParams(
            dimension_semantics=("parallel",),
        ),
        cost_estimate=cost,
    )(xb, w_pack, b_pack)

    return out[:B, :num_classes]


def init_params(key, in_features, num_classes):
    dims = [in_features, 512, 256, 128, 64, 32, num_classes]
    params = []
    for i in range(len(dims) - 1):
        key, kw, kb = jax.random.split(key, 3)
        bound = 1.0 / jnp.sqrt(dims[i])
        w = jax.random.uniform(kw, (dims[i], dims[i + 1]),
                               minval=-bound, maxval=bound, dtype=jnp.float32)
        b = jax.random.uniform(kb, (1, dims[i + 1]),
                               minval=-bound, maxval=bound, dtype=jnp.float32)
        params.append((w, b))
    return params


def reference_forward(x, params):
    """Pure-JAX reference mimicking the kernel's bf16-input / f32-accum matmuls."""
    h = x.astype(jnp.float32)
    for i, (w, b) in enumerate(params):
        y = jnp.dot(h.astype(jnp.bfloat16), w.astype(jnp.bfloat16),
                    preferred_element_type=jnp.float32) + b
        h = jnp.maximum(y, 0.0) if i < len(params) - 1 else y
    return jax.nn.softmax(h, axis=1)


if __name__ == "__main__":
    batch = 8
    in_features = 32
    num_classes = 5

    key = jax.random.PRNGKey(0)
    key, kx = jax.random.split(key)
    x = jax.random.normal(kx, (batch, in_features), dtype=jnp.float32)
    params = init_params(key, in_features, num_classes)

    out = very_advanced_ffnn(x, params)
    out = jax.block_until_ready(out)

    ref = reference_forward(x, params)
    assert out.shape == (batch, num_classes)
    assert jnp.allclose(out, ref, atol=5e-3, rtol=5e-3)
    assert jnp.allclose(jnp.sum(out, axis=1), 1.0, atol=1e-3)

    print("KERNEL_OK")
</pallas_src>

<mosaic_0001>
module attributes {stable_mosaic.version = 11 : i64} {
  func.func @kernel(%arg0: i32, %arg1: memref<16x32xbf16, #tpu.memory_space<vmem>>, %arg2: memref<1184x512xbf16, #tpu.memory_space<vmem>>, %arg3: memref<8x512xf32, #tpu.memory_space<vmem>>, %arg4: memref<16x128xf32, #tpu.memory_space<vmem>>) attributes {dimension_semantics = [#tpu.dimension_semantics<parallel>], iteration_bounds = array<i64: 1>, scalar_prefetch = 0 : i64, scratch_operands = 0 : i64, tpu.core_type = #tpu.core_type<tc>, window_params = [{transform_indices = @transform_0, window_bounds = array<i64: 16, 32>}, {pipeline_mode = #tpu.pipeline_mode<synchronous>, transform_indices = @transform_1, window_bounds = array<i64: 1184, 512>}, {pipeline_mode = #tpu.pipeline_mode<synchronous>, transform_indices = @transform_2, window_bounds = array<i64: 8, 512>}, {transform_indices = @transform_3, window_bounds = array<i64: 16, 128>}]} {
    %c0 = arith.constant 0 : index
    %c0_0 = arith.constant 0 : index
    %0 = vector.load %arg1[%c0, %c0_0] : memref<16x32xbf16, #tpu.memory_space<vmem>>, vector<16x32xbf16>
    %c0_1 = arith.constant 0 : index
    %c0_2 = arith.constant 0 : index
    %1 = vector.load %arg2[%c0_1, %c0_2] : memref<1184x512xbf16, #tpu.memory_space<vmem>>, vector<32x512xbf16>
    %c0_3 = arith.constant 0 : index
    %c0_4 = arith.constant 0 : index
    %2 = vector.load %arg3[%c0_3, %c0_4] : memref<8x512xf32, #tpu.memory_space<vmem>>, vector<1x512xf32>
    %cst = arith.constant dense<0.000000e+00> : vector<16x512xf32>
    %3 = tpu.matmul %0, %1, %cst {dimension_numbers = #tpu.dot_dimension_numbers<[1], [0], [0], [1], [0, 0, 1, 1], [], []>} : vector<16x32xbf16>, vector<32x512xbf16>, vector<16x512xf32> -> vector<16x512xf32>
    %4 = vector.broadcast %2 : vector<1x512xf32> to vector<16x512xf32>
    %5 = arith.addf %3, %4 : vector<16x512xf32>
    %cst_5 = arith.constant 0.000000e+00 : f32
    %6 = vector.broadcast %cst_5 : f32 to vector<16x512xf32>
    %7 = arith.maximumf %5, %6 : vector<16x512xf32>
    %8 = arith.truncf %7 : vector<16x512xf32> to vector<16x512xbf16>
    %c32 = arith.constant 32 : index
    %c0_6 = arith.constant 0 : index
    %9 = vector.load %arg2[%c32, %c0_6] : memref<1184x512xbf16, #tpu.memory_space<vmem>>, vector<512x256xbf16>
    %c1 = arith.constant 1 : index
    %c0_7 = arith.constant 0 : index
    %10 = vector.load %arg3[%c1, %c0_7] : memref<8x512xf32, #tpu.memory_space<vmem>>, vector<1x256xf32>
    %cst_8 = arith.constant dense<0.000000e+00> : vector<16x256xf32>
    %11 = tpu.matmul %8, %9, %cst_8 {dimension_numbers = #tpu.dot_dimension_numbers<[1], [0], [0], [1], [0, 0, 1, 1], [], []>} : vector<16x512xbf16>, vector<512x256xbf16>, vector<16x256xf32> -> vector<16x256xf32>
    %12 = vector.broadcast %10 : vector<1x256xf32> to vector<16x256xf32>
    %13 = arith.addf %11, %12 : vector<16x256xf32>
    %cst_9 = arith.constant 0.000000e+00 : f32
    %14 = vector.broadcast %cst_9 : f32 to vector<16x256xf32>
    %15 = arith.maximumf %13, %14 : vector<16x256xf32>
    %16 = arith.truncf %15 : vector<16x256xf32> to vector<16x256xbf16>
    %c544 = arith.constant 544 : index
    %c0_10 = arith.constant 0 : index
    %17 = vector.load %arg2[%c544, %c0_10] : memref<1184x512xbf16, #tpu.memory_space<vmem>>, vector<256x128xbf16>
    %c2 = arith.constant 2 : index
    %c0_11 = arith.constant 0 : index
    %18 = vector.load %arg3[%c2, %c0_11] : memref<8x512xf32, #tpu.memory_space<vmem>>, vector<1x128xf32>
    %cst_12 = arith.constant dense<0.000000e+00> : vector<16x128xf32>
    %19 = tpu.matmul %16, %17, %cst_12 {dimension_numbers = #tpu.dot_dimension_numbers<[1], [0], [0], [1], [0, 0, 1, 1], [], []>} : vector<16x256xbf16>, vector<256x128xbf16>, vector<16x128xf32> -> vector<16x128xf32>
    %20 = vector.broadcast %18 : vector<1x128xf32> to vector<16x128xf32>
    %21 = arith.addf %19, %20 : vector<16x128xf32>
    %cst_13 = arith.constant 0.000000e+00 : f32
    %22 = vector.broadcast %cst_13 : f32 to vector<16x128xf32>
    %23 = arith.maximumf %21, %22 : vector<16x128xf32>
    %24 = arith.truncf %23 : vector<16x128xf32> to vector<16x128xbf16>
    %c800 = arith.constant 800 : index
    %c0_14 = arith.constant 0 : index
    %25 = vector.load %arg2[%c800, %c0_14] : memref<1184x512xbf16, #tpu.memory_space<vmem>>, vector<128x128xbf16>
    %c3 = arith.constant 3 : index
    %c0_15 = arith.constant 0 : index
    %26 = vector.load %arg3[%c3, %c0_15] : memref<8x512xf32, #tpu.memory_space<vmem>>, vector<1x128xf32>
    %cst_16 = arith.constant dense<0.000000e+00> : vector<16x128xf32>
    %27 = tpu.matmul %24, %25, %cst_16 {dimension_numbers = #tpu.dot_dimension_numbers<[1], [0], [0], [1], [0, 0, 1, 1], [], []>} : vector<16x128xbf16>, vector<128x128xbf16>, vector<16x128xf32> -> vector<16x128xf32>
    %28 = vector.broadcast %26 : vector<1x128xf32> to vector<16x128xf32>
    %29 = arith.addf %27, %28 : vector<16x128xf32>
    %cst_17 = arith.constant 0.000000e+00 : f32
    %30 = vector.broadcast %cst_17 : f32 to vector<16x128xf32>
    %31 = arith.maximumf %29, %30 : vector<16x128xf32>
    %32 = arith.truncf %31 : vector<16x128xf32> to vector<16x128xbf16>
    %c928 = arith.constant 928 : index
    %c0_18 = arith.constant 0 : index
    %33 = vector.load %arg2[%c928, %c0_18] : memref<1184x512xbf16, #tpu.memory_space<vmem>>, vector<128x128xbf16>
    %c4 = arith.constant 4 : index
    %c0_19 = arith.constant 0 : index
    %34 = vector.load %arg3[%c4, %c0_19] : memref<8x512xf32, #tpu.memory_space<vmem>>, vector<1x128xf32>
    %cst_20 = arith.constant dense<0.000000e+00> : vector<16x128xf32>
    %35 = tpu.matmul %32, %33, %cst_20 {dimension_numbers = #tpu.dot_dimension_numbers<[1], [0], [0], [1], [0, 0, 1, 1], [], []>} : vector<16x128xbf16>, vector<128x128xbf16>, vector<16x128xf32> -> vector<16x128xf32>
    %36 = vector.broadcast %34 : vector<1x128xf32> to vector<16x128xf32>
    %37 = arith.addf %35, %36 : vector<16x128xf32>
    %cst_21 = arith.constant 0.000000e+00 : f32
    %38 = vector.broadcast %cst_21 : f32 to vector<16x128xf32>
    %39 = arith.maximumf %37, %38 : vector<16x128xf32>
    %40 = arith.truncf %39 : vector<16x128xf32> to vector<16x128xbf16>
    %c1056 = arith.constant 1056 : index
    %c0_22 = arith.constant 0 : index
    %41 = vector.load %arg2[%c1056, %c0_22] : memref<1184x512xbf16, #tpu.memory_space<vmem>>, vector<128x128xbf16>
    %c5 = arith.constant 5 : index
    %c0_23 = arith.constant 0 : index
    %42 = vector.load %arg3[%c5, %c0_23] : memref<8x512xf32, #tpu.memory_space<vmem>>, vector<1x128xf32>
    %cst_24 = arith.constant dense<0.000000e+00> : vector<16x128xf32>
    %43 = tpu.matmul %40, %41, %cst_24 {dimension_numbers = #tpu.dot_dimension_numbers<[1], [0], [0], [1], [0, 0, 1, 1], [], []>} : vector<16x128xbf16>, vector<128x128xbf16>, vector<16x128xf32> -> vector<16x128xf32>
    %44 = vector.broadcast %42 : vector<1x128xf32> to vector<16x128xf32>
    %45 = arith.addf %43, %44 : vector<16x128xf32>
    %46 = tpu.iota {dimensions = array<i32: 1>} : vector<16x128xi32>
    %c5_i32 = arith.constant 5 : i32
    %47 = vector.broadcast %c5_i32 : i32 to vector<16x128xi32>
    %48 = arith.cmpi slt, %46, %47 : vector<16x128xi32>
    %cst_25 = arith.constant -1.000000e+30 : f32
    %49 = vector.broadcast %cst_25 : f32 to vector<16x128xf32>
    %50 = arith.select %48, %45, %49 : vector<16x128xi1>, vector<16x128xf32>
    %cst_26 = arith.constant dense<0xFF800000> : vector<16xf32>
    %51 = vector.multi_reduction <maximumf>, %50, %cst_26 [1] : vector<16x128xf32> to vector<16xf32>
    %52 = vector.shape_cast %51 : vector<16xf32> to vector<16x1xf32>
    %53 = vector.broadcast %52 : vector<16x1xf32> to vector<16x128xf32>
    %54 = arith.subf %50, %53 : vector<16x128xf32>
    %55 = math.exp %54 : vector<16x128xf32>
    %cst_27 = arith.constant dense<0.000000e+00> : vector<16xf32>
    %56 = vector.multi_reduction <add>, %55, %cst_27 [1] : vector<16x128xf32> to vector<16xf32>
    %57 = vector.shape_cast %56 : vector<16xf32> to vector<16x1xf32>
    %58 = vector.broadcast %57 : vector<16x1xf32> to vector<16x128xf32>
    %59 = arith.divf %55, %58 : vector<16x128xf32>
    %c0_28 = arith.constant 0 : index
    %c0_29 = arith.constant 0 : index
    %60 = vector.load %arg4[%c0_28, %c0_29] : memref<16x128xf32, #tpu.memory_space<vmem>>, vector<16x128xf32>
    tpu.vector_store %arg4[%c0_28, %c0_29], %59 {strides = array<i32>} : memref<16x128xf32, #tpu.memory_space<vmem>>, vector<16x128xf32>,
    return
  }
  func.func @transform_0(%arg0: i32) -> (i32, i32) {
    %c0_i32 = arith.constant 0 : i32
    %c0_i32_0 = arith.constant 0 : i32
    return %arg0, %c0_i32 : i32, i32
  }
  func.func @transform_1(%arg0: i32) -> (i32, i32) {
    %c0_i32 = arith.constant 0 : i32
    %c0_i32_0 = arith.constant 0 : i32
    %c0_i32_1 = arith.constant 0 : i32
    return %c0_i32, %c0_i32_0 : i32, i32
  }
  func.func @transform_2(%arg0: i32) -> (i32, i32) {
    %c0_i32 = arith.constant 0 : i32
    %c0_i32_0 = arith.constant 0 : i32
    %c0_i32_1 = arith.constant 0 : i32
    return %c0_i32, %c0_i32_0 : i32, i32
  }
  func.func @transform_3(%arg0: i32) -> (i32, i32) {
    %c0_i32 = arith.constant 0 : i32
    %c0_i32_0 = arith.constant 0 : i32
    return %arg0, %c0_i32 : i32, i32
  }
}

</mosaic_0001>

<llo_original>
// kernel: tpu_custom_call.1
$region0: #{tpu_custom_call.1}
  #allocation0 [shape = 'u32[]', space=smem, size = 0x4, offset = 0x4, fixed_abs, tag = 'smem constant byte address 0x4 - core index']
  #allocation1 [shape = 'u32[144,128]{1,0:T(1,128)}', space=vmem, size = 0x12000, scoped, tag = 'internal scratch']
  %s0 = inlined_call_operand.hbm [shape: bf16[16,32], index: 0, kind: input, shape index: {}]
  %s1 = inlined_call_operand.hbm [shape: bf16[1184,512], index: 1, kind: input, shape index: {}]
  %s2 = inlined_call_operand.hbm [shape: f32[8,512], index: 2, kind: input, shape index: {}]
  %s3 = inlined_call_operand.hbm [shape: f32[16,128], index: 3, kind: output, shape index: {}]
  %s4 = sld [smem:[#allocation0]]
  $region34: #{tpu_custom_call.1} parent=0
    _
  %s6 = ssub.s32 1, %s4
  %s7 = scalar_select 0, %s6, %s4
  $region1: #{tpu_custom_call.1} parent=0
    #allocation2 [shape = 'u8[4096]{0}', space=vmem, size = 0x1000, scoped, tag = 'input window, operand 0, single buffered']
    #allocation3 [shape = 's32[1]{0}', space=sflag, size = 0x4, scoped, tag = 'scoped memory for tpu_custom_call.1']
    #allocation4 [shape = 's32[1]{0}', space=sflag, size = 0x4, scoped, tag = 'scoped memory for tpu_custom_call.1']
    #allocation5 [shape = 'u8[1212416]{0}', space=vmem, size = 0x128000, scoped, tag = 'input window, operand 1, single buffered']
    #allocation6 [shape = 's32[1]{0}', space=sflag, size = 0x4, scoped, tag = 'scoped memory for tpu_custom_call.1']
    #allocation7 [shape = 'u8[16384]{0}', space=vmem, size = 0x4000, scoped, tag = 'input window, operand 2, single buffered']
    #allocation8 [shape = 'u8[8192]{0}', space=vmem, size = 0x2000, scoped, tag = 'output window, operand 0, single buffered']
    %8 = vsyncpa [#allocation3], 0
    %9 = vsyncpa [#allocation6], 0
    %10 = vsyncpa [#allocation4], 0
    // Predicated region
    $region2: #{tpu_custom_call.1} parent=1 // pred_check
      _
    $region3: #{tpu_custom_call.1} parent=1 // pred_check_branch
      %12 = sbr.rel (0) target = $region5
    $region4: #{tpu_custom_call.1} parent=1 // pred_region
      %s14 = ssub.s32 128, 128
      %15 = vsyncadd [#allocation3], %s14
      %s16 = sshll.u32 [#allocation2], 4
      %s17 = int_to_ptr.vmem [resolvable:$true] %s16
      %22 = dma.hbm_to_vmem [thread:$0]  %s0, 128, %s17, [#allocation3], 64, 64, 4
    $region5: #{tpu_custom_call.1} parent=1 // pred_fallthru
      _
    // Predicated region
    $region6: #{tpu_custom_call.1} parent=1 // pred_check
      _
    $region7: #{tpu_custom_call.1} parent=1 // pred_check_branch
      %24 = sbr.rel (0) target = $region9
    $region8: #{tpu_custom_call.1} parent=1 // pred_region
      %s26 = ssub.s32 37888, 37888
      %27 = vsyncadd [#allocation6], %s26
      %s28 = sshll.u32 [#allocation5], 4
      %s29 = int_to_ptr.vmem [resolvable:$true] %s28
      %34 = dma.hbm_to_vmem [thread:$0]  %s1, 37888, %s29, [#allocation6], 256, 256, 16
    $region9: #{tpu_custom_call.1} parent=1 // pred_fallthru
      _
    // Predicated region
    $region10: #{tpu_custom_call.1} parent=1 // pred_check
      _
    $region11: #{tpu_custom_call.1} parent=1 // pred_check_branch
      %36 = sbr.rel (0) target = $region13
    $region12: #{tpu_custom_call.1} parent=1 // pred_region
      %s38 = ssub.s32 512, 512
      %39 = vsyncadd [#allocation6], %s38
      %s41 = sshll.u32 [#allocation7], 4
      %s42 = int_to_ptr.vmem [resolvable:$true] %s41
      %44 = dma.hbm_to_vmem [thread:$0]  %s2, 512, %s42, [#allocation6]
    $region13: #{tpu_custom_call.1} parent=1 // pred_fallthru
      _
    // Predicated region
    $region14: #{tpu_custom_call.1} parent=1 // pred_check
      _
    $region15: #{tpu_custom_call.1} parent=1 // pred_check_branch
      %46 = sbr.rel (0) target = $region17
    $region16: #{tpu_custom_call.1} parent=1 // pred_region
      %47 = dma.done [#allocation3], 128
    $region17: #{tpu_custom_call.1} parent=1 // pred_fallthru
      _
    // Predicated region
    $region18: #{tpu_custom_call.1} parent=1 // pred_check
      _
    $region19: #{tpu_custom_call.1} parent=1 // pred_check_branch
      %49 = sbr.rel (0) target = $region21
    $region20: #{tpu_custom_call.1} parent=1 // pred_region
      %50 = dma.done [#allocation6], 37888
    $region21: #{tpu_custom_call.1} parent=1 // pred_fallthru
      _
    // Predicated region
    $region22: #{tpu_custom_call.1} parent=1 // pred_check
      _
    $region23: #{tpu_custom_call.1} parent=1 // pred_check_branch
      %52 = sbr.rel (0) target = $region25
    $region24: #{tpu_custom_call.1} parent=1 // pred_region
      %53 = dma.done [#allocation6], 512
    $region25: #{tpu_custom_call.1} parent=1 // pred_fallthru
      _
    %v55 = vld [vmem:[#allocation2] sm:$0xf]
    %v56 = vld [vmem:[#allocation2 + $0x4] sm:$0xf]
    %v57 = vld [vmem:[#allocation5] sm:$0xff]
    %v58 = vld [vmem:[#allocation5 + $0x8] sm:$0xff]
    %v59 = vld [vmem:[#allocation5 + $0x10] sm:$0xff]
    %v60 = vld [vmem:[#allocation5 + $0x18] sm:$0xff]
    %v61 = vld [vmem:[#allocation5 + $0x20] sm:$0xff]
    %v62 = vld [vmem:[#allocation5 + $0x28] sm:$0xff]
    %v63 = vld [vmem:[#allocation5 + $0x30] sm:$0xff]
    %v64 = vld [vmem:[#allocation5 + $0x38] sm:$0xff]
    %v65 = vld [vmem:[#allocation7] ss:$8 sm:$0xf]
    %v67 = vlaneseq
    %v68 = vshrl.u32 %v67, 7
    %v69 = vsub.s32 0, %v68
    %v70 = vrot.slane %v65, %v69
    %v71 = vlaneseq
    %v72 = vshrl.u32 %v71, 7
    %v73 = vsub.s32 1, %v72
    %v74 = vrot.slane %v65, %v73
    %v75 = vlaneseq
    %v76 = vshrl.u32 %v75, 7
    %v77 = vsub.s32 2, %v76
    %v78 = vrot.slane %v65, %v77
    %v79 = vlaneseq
    %v80 = vshrl.u32 %v79, 7
    %v81 = vsub.s32 3, %v80
    %v82 = vrot.slane %v65, %v81
    %v89 = vunpack.c.l.b16 %v55
    %v90 = vunpack.c.l.b16 %v56
    %v91 = vpack.c.b16 %v90, %v89
    %v100 = vunpack.c.l.b16 %v57
    %v101 = vunpack.c.h.b16 %v57
    %v102 = vunpack.c.l.b16 %v58
    %v103 = vunpack.c.h.b16 %v58
    %v104 = vunpack.c.l.b16 %v59
    %v105 = vunpack.c.h.b16 %v59
    %v106 = vunpack.c.l.b16 %v60
    %v107 = vunpack.c.h.b16 %v60
    %v108 = vunpack.c.l.b16 %v61
    %v109 = vunpack.c.h.b16 %v61
    %v110 = vunpack.c.l.b16 %v62
    %v111 = vunpack.c.h.b16 %v62
    %v112 = vunpack.c.l.b16 %v63
    %v113 = vunpack.c.h.b16 %v63
    %v114 = vunpack.c.l.b16 %v64
    %v115 = vunpack.c.h.b16 %v64
    %v116 = vpack.c.b16 %v104, %v100
    %v117 = vpack.c.b16 %v105, %v101
    %v118 = vpack.c.b16 %v106, %v102
    %v119 = vpack.c.b16 %v107, %v103
    %v120 = vpack.c.b16 %v112, %v108
    %v121 = vpack.c.b16 %v113, %v109
    %v122 = vpack.c.b16 %v114, %v110
    %v123 = vpack.c.b16 %v115, %v111
    %vm132 = vcmask 261120
    %v134 = vsel %vm132, %v91, 0
    %136 = vmatprep.subr.bf16.mxu0 %v117
    %137 = vmatpush1.bf16.msra.mxu0 %v116
    %138 = vmatprep.subr.bf16.mxu0 %v121
    %139 = vmatpush1.bf16.msra.mxu0 %v120
    %140 = vmatprep.subr.bf16.mxu0 0
    %141 = vmatpush1.bf16.msra.mxu0 0
    %142 = vmatprep.subr.bf16.mxu0 0
    %143 = vmatpush1.bf16.msra.mxu0 0
    %144 = vmatprep.subr.bf16.mxu0 0
    %145 = vmatpush1.bf16.msra.mxu0 0
    %146 = vmatprep.subr.bf16.mxu0 0
    %147 = vmatpush1.bf16.msra.mxu0 0
    %148 = vmatprep.subr.bf16.mxu0 0
    %149 = vmatpush1.bf16.msra.mxu0 0
    %150 = vmatprep.subr.bf16.mxu0 0
    %151 = vmatpush1.bf16.msra.mxu0 0
    %152 = vmatprep.subr.bf16.mxu0 0
    %153 = vmatpush1.bf16.msra.mxu0 0
    %154 = vmatprep.subr.bf16.mxu0 0
    %155 = vmatpush1.bf16.msra.mxu0 0
    %156 = vmatprep.subr.bf16.mxu0 0
    %157 = vmatpush1.bf16.msra.mxu0 0
    %158 = vmatprep.subr.bf16.mxu0 0
    %159 = vmatpush1.bf16.msra.mxu0 0
    %160 = vmatprep.subr.bf16.mxu0 0
    %161 = vmatpush1.bf16.msra.mxu0 0
    %162 = vmatprep.subr.bf16.mxu0 0
    %163 = vmatpush1.bf16.msra.mxu0 0
    %164 = vmatprep.subr.bf16.mxu0 0
    %165 = vmatpush1.bf16.msra.mxu0 0
    %166 = vmatprep.subr.bf16.mxu0 0
    %167 = vmatpush1.bf16.msra.mxu0 0
    %168 = vmatprep.mubr.bf16.mxu0 0
    %169 = vmatmul.mubr.bf16.gmra.mrb[0].mxu0 %v134
    %v170 = vpop.f32.mrb[0].mxu0
    %v171 = vadd.f32 %v70, %v170
    %v172 = vpop.f32.mrb[0].mxu0
    %v173 = vadd.f32 %v74, %v172
    %v174 = vpop.f32.mrb[0].mxu0
    %v175 = vadd.f32 %v70, %v174
    %v176 = vpop.f32.mrb[0].mxu0
    %v177 = vadd.f32 %v74, %v176
    %178 = vdwg.mxu0
    %179 = vmatprep.subr.bf16.mxu0 %v119
    %180 = vmatpush1.bf16.msra.mxu0 %v118
    %181 = vmatprep.subr.bf16.mxu0 %v123
    %182 = vmatpush1.bf16.msra.mxu0 %v122
    %183 = vmatprep.subr.bf16.mxu0 0
    %184 = vmatpush1.bf16.msra.mxu0 0
    %185 = vmatprep.subr.bf16.mxu0 0
    %186 = vmatpush1.bf16.msra.mxu0 0
    %187 = vmatprep.subr.bf16.mxu0 0
    %188 = vmatpush1.bf16.msra.mxu0 0
    %189 = vmatprep.subr.bf16.mxu0 0
    %190 = vmatpush1.bf16.msra.mxu0 0
    %191 = vmatprep.subr.bf16.mxu0 0
    %192 = vmatpush1.bf16.msra.mxu0 0
    %193 = vmatprep.subr.bf16.mxu0 0
    %194 = vmatpush1.bf16.msra.mxu0 0
    %195 = vmatprep.subr.bf16.mxu0 0
    %196 = vmatpush1.bf16.msra.mxu0 0
    %197 = vmatprep.subr.bf16.mxu0 0
    %198 = vmatpush1.bf16.msra.mxu0 0
    %199 = vmatprep.subr.bf16.mxu0 0
    %200 = vmatpush1.bf16.msra.mxu0 0
    %201 = vmatprep.subr.bf16.mxu0 0
    %202 = vmatpush1.bf16.msra.mxu0 0
    %203 = vmatprep.subr.bf16.mxu0 0
    %204 = vmatpush1.bf16.msra.mxu0 0
    %205 = vmatprep.subr.bf16.mxu0 0
    %206 = vmatpush1.bf16.msra.mxu0 0
    %207 = vmatprep.subr.bf16.mxu0 0
    %208 = vmatpush1.bf16.msra.mxu0 0
    %209 = vmatprep.subr.bf16.mxu0 0
    %210 = vmatpush1.bf16.msra.mxu0 0
    %211 = vmatprep.mubr.bf16.mxu0 0
    %212 = vmatmul.mubr.bf16.gmra.mrb[0].mxu0 %v134
    %v213 = vpop.f32.mrb[0].mxu0
    %v214 = vadd.f32 %v78, %v213
    %v215 = vpop.f32.mrb[0].mxu0
    %v216 = vadd.f32 %v82, %v215
    %v217 = vpop.f32.mrb[0].mxu0
    %v218 = vadd.f32 %v78, %v217
    %v219 = vpop.f32.mrb[0].mxu0
    %v220 = vadd.f32 %v82, %v219
    %221 = vdwg.mxu0
    %v222 = vmax.f32 %v171, 0.0
    %v223 = vmax.f32 %v173, 0.0
    %v224 = vmax.f32 %v214, 0.0
    %v225 = vmax.f32 %v216, 0.0
    %v226 = vmax.f32 %v175, 0.0
    %v227 = vmax.f32 %v177, 0.0
    %v228 = vmax.f32 %v218, 0.0
    %v229 = vmax.f32 %v220, 0.0
    %v230 = vpack.c.bf16 %v226, %v222
    %v231 = vpack.c.bf16 %v227, %v223
    %v232 = vpack.c.bf16 %v228, %v224
    %v233 = vpack.c.bf16 %v229, %v225
    %v234 = vld [vmem:[#allocation5 + $0x40] sm:$0xff]
    %v235 = vld [vmem:[#allocation5 + $0x50] sm:$0xff]
    %v236 = vld [vmem:[#allocation5 + $0x60] sm:$0xff]
    %v237 = vld [vmem:[#allocation5 + $0x70] sm:$0xff]
    %v238 = vld [vmem:[#allocation5 + $0x80] sm:$0xff]
    %v239 = vld [vmem:[#allocation5 + $0x90] sm:$0xff]
    %v240 = vld [vmem:[#allocation5 + $0xa0] sm:$0xff]
    %v241 = vld [vmem:[#allocation5 + $0xb0] sm:$0xff]
    %v242 = vld [vmem:[#allocation5 + $0xc0] sm:$0xff]
    %v243 = vld [vmem:[#allocation5 + $0xd0] sm:$0xff]
    %v244 = vld [vmem:[#allocation5 + $0xe0] sm:$0xff]
    %v245 = vld [vmem:[#allocation5 + $0xf0] sm:$0xff]
    %v246 = vld [vmem:[#allocation5 + $0x100] sm:$0xff]
    %v247 = vld [vmem:[#allocation5 + $0x110] sm:$0xff]
    %v248 = vld [vmem:[#allocation5 + $0x120] sm:$0xff]
    %v249 = vld [vmem:[#allocation5 + $0x130] sm:$0xff]
    %v250 = vld [vmem:[#allocation5 + $0x140] sm:$0xff]
    %v251 = vld [vmem:[#allocation5 + $0x150] sm:$0xff]
    %v252 = vld [vmem:[#allocation5 + $0x160] sm:$0xff]
    %v253 = vld [vmem:[#allocation5 + $0x170] sm:$0xff]
    %v254 = vld [vmem:[#allocation5 + $0x180] sm:$0xff]
    %v255 = vld [vmem:[#allocation5 + $0x190] sm:$0xff]
    %v256 = vld [vmem:[#allocation5 + $0x1a0] sm:$0xff]
    %v257 = vld [vmem:[#allocation5 + $0x1b0] sm:$0xff]
    %v258 = vld [vmem:[#allocation5 + $0x1c0] sm:$0xff]
    %v259 = vld [vmem:[#allocation5 + $0x1d0] sm:$0xff]
    %v260 = vld [vmem:[#allocation5 + $0x1e0] sm:$0xff]
    %v261 = vld [vmem:[#allocation5 + $0x1f0] sm:$0xff]
    %v262 = vld [vmem:[#allocation5 + $0x200] sm:$0xff]
    %v263 = vld [vmem:[#allocation5 + $0x210] sm:$0xff]
    %v264 = vld [vmem:[#allocation5 + $0x220] sm:$0xff]
    %v265 = vld [vmem:[#allocation5 + $0x230] sm:$0xff]
    %v266 = vld [vmem:[#allocation5 + $0x240] sm:$0xff]
    %v267 = vld [vmem:[#allocation5 + $0x250] sm:$0xff]
    %v268 = vld [vmem:[#allocation5 + $0x260] sm:$0xff]
    %v269 = vld [vmem:[#allocation5 + $0x270] sm:$0xff]
    %v270 = vld [vmem:[#allocation5 + $0x280] sm:$0xff]
    %v271 = vld [vmem:[#allocation5 + $0x290] sm:$0xff]
    %v272 = vld [vmem:[#allocation5 + $0x2a0] sm:$0xff]
    %v273 = vld [vmem:[#allocation5 + $0x2b0] sm:$0xff]
    %v274 = vld [vmem:[#allocation5 + $0x2c0] sm:$0xff]
    %v275 = vld [vmem:[#allocation5 + $0x2d0] sm:$0xff]
    %v276 = vld [vmem:[#allocation5 + $0x2e0] sm:$0xff]
    %v277 = vld [vmem:[#allocation5 + $0x2f0] sm:$0xff]
    %v278 = vld [vmem:[#allocation5 + $0x300] sm:$0xff]
    %v279 = vld [vmem:[#allocation5 + $0x310] sm:$0xff]
    %v280 = vld [vmem:[#allocation5 + $0x320] sm:$0xff]
    %v281 = vld [vmem:[#allocation5 + $0x330] sm:$0xff]
    %v282 = vld [vmem:[#allocation5 + $0x340] sm:$0xff]
    %v283 = vld [vmem:[#allocation5 + $0x350] sm:$0xff]
    %v284 = vld [vmem:[#allocation5 + $0x360] sm:$0xff]
    %v285 = vld [vmem:[#allocation5 + $0x370] sm:$0xff]
    %v286 = vld [vmem:[#allocation5 + $0x380] sm:$0xff]
    %v287 = vld [vmem:[#allocation5 + $0x390] sm:$0xff]
    %v288 = vld [vmem:[#allocation5 + $0x3a0] sm:$0xff]
    %v289 = vld [vmem:[#allocation5 + $0x3b0] sm:$0xff]
    %v290 = vld [vmem:[#allocation5 + $0x3c0] sm:$0xff]
    %v291 = vld [vmem:[#allocation5 + $0x3d0] sm:$0xff]
    %v292 = vld [vmem:[#allocation5 + $0x3e0] sm:$0xff]
    %v293 = vld [vmem:[#allocation5 + $0x3f0] sm:$0xff]
    %v294 = vld [vmem:[#allocation5 + $0x400] sm:$0xff]
    %v295 = vld [vmem:[#allocation5 + $0x410] sm:$0xff]
    %v296 = vld [vmem:[#allocation5 + $0x420] sm:$0xff]
    %v297 = vld [vmem:[#allocation5 + $0x430] sm:$0xff]
    %s298 = scalar_lea.vmem [#allocation7], 1
    %v299 = vld [vmem:[%s298] ss:$8 sm:$0x3]
    %v301 = vlaneseq
    %v302 = vshrl.u32 %v301, 7
    %v303 = vsub.s32 0, %v302
    %v304 = vrot.slane %v299, %v303
    %v305 = vlaneseq
    %v306 = vshrl.u32 %v305, 7
    %v307 = vsub.s32 1, %v306
    %v308 = vrot.slane %v299, %v307
    %v375 = vunpack.c.l.b16 %v234
    %v376 = vunpack.c.h.b16 %v234
    %v377 = vunpack.c.l.b16 %v235
    %v378 = vunpack.c.h.b16 %v235
    %v379 = vunpack.c.l.b16 %v236
    %v380 = vunpack.c.h.b16 %v236
    %v381 = vunpack.c.l.b16 %v237
    %v382 = vunpack.c.h.b16 %v237
    %v383 = vunpack.c.l.b16 %v238
    %v384 = vunpack.c.h.b16 %v238
    %v385 = vunpack.c.l.b16 %v239
    %v386 = vunpack.c.h.b16 %v239
    %v387 = vunpack.c.l.b16 %v240
    %v388 = vunpack.c.h.b16 %v240
    %v389 = vunpack.c.l.b16 %v241
    %v390 = vunpack.c.h.b16 %v241
    %v391 = vunpack.c.l.b16 %v242
    %v392 = vunpack.c.h.b16 %v242
    %v393 = vunpack.c.l.b16 %v243
    %v394 = vunpack.c.h.b16 %v243
    %v395 = vunpack.c.l.b16 %v244
    %v396 = vunpack.c.h.b16 %v244
    %v397 = vunpack.c.l.b16 %v245
    %v398 = vunpack.c.h.b16 %v245
    %v399 = vunpack.c.l.b16 %v246
    %v400 = vunpack.c.h.b16 %v246
    %v401 = vunpack.c.l.b16 %v247
    %v402 = vunpack.c.h.b16 %v247
    %v403 = vunpack.c.l.b16 %v248
    %v404 = vunpack.c.h.b16 %v248
    %v405 = vunpack.c.l.b16 %v249
    %v406 = vunpack.c.h.b16 %v249
    %v407 = vunpack.c.l.b16 %v250
    %v408 = vunpack.c.h.b16 %v250
    %v409 = vunpack.c.l.b16 %v251
    %v410 = vunpack.c.h.b16 %v251
    %v411 = vunpack.c.l.b16 %v252
    %v412 = vunpack.c.h.b16 %v252
    %v413 = vunpack.c.l.b16 %v253
    %v414 = vunpack.c.h.b16 %v253
    %v415 = vunpack.c.l.b16 %v254
    %v416 = vunpack.c.h.b16 %v254
    %v417 = vunpack.c.l.b16 %v255
    %v418 = vunpack.c.h.b16 %v255
    %v419 = vunpack.c.l.b16 %v256
    %v420 = vunpack.c.h.b16 %v256
    %v421 = vunpack.c.l.b16 %v257
    %v422 = vunpack.c.h.b16 %v257
    %v423 = vunpack.c.l.b16 %v258
    %v424 = vunpack.c.h.b16 %v258
    %v425 = vunpack.c.l.b16 %v259
    %v426 = vunpack.c.h.b16 %v259
    %v427 = vunpack.c.l.b16 %v260
    %v428 = vunpack.c.h.b16 %v260
    %v429 = vunpack.c.l.b16 %v261
    %v430 = vunpack.c.h.b16 %v261
    %v431 = vunpack.c.l.b16 %v262
    %v432 = vunpack.c.h.b16 %v262
    %v433 = vunpack.c.l.b16 %v263
    %v434 = vunpack.c.h.b16 %v263
    %v435 = vunpack.c.l.b16 %v264
    %v436 = vunpack.c.h.b16 %v264
    %v437 = vunpack.c.l.b16 %v265
    %v438 = vunpack.c.h.b16 %v265
    %v439 = vunpack.c.l.b16 %v266
    %v440 = vunpack.c.h.b16 %v266
    %v441 = vunpack.c.l.b16 %v267
    %v442 = vunpack.c.h.b16 %v267
    %v443 = vunpack.c.l.b16 %v268
    %v444 = vunpack.c.h.b16 %v268
    %v445 = vunpack.c.l.b16 %v269
    %v446 = vunpack.c.h.b16 %v269
    %v447 = vunpack.c.l.b16 %v270
    %v448 = vunpack.c.h.b16 %v270
    %v449 = vunpack.c.l.b16 %v271
    %v450 = vunpack.c.h.b16 %v271
    %v451 = vunpack.c.l.b16 %v272
    %v452 = vunpack.c.h.b16 %v272
    %v453 = vunpack.c.l.b16 %v273
    %v454 = vunpack.c.h.b16 %v273
    %v455 = vunpack.c.l.b16 %v274
    %v456 = vunpack.c.h.b16 %v274
    %v457 = vunpack.c.l.b16 %v275
    %v458 = vunpack.c.h.b16 %v275
    %v459 = vunpack.c.l.b16 %v276
    %v460 = vunpack.c.h.b16 %v276
    %v461 = vunpack.c.l.b16 %v277
    %v462 = vunpack.c.h.b16 %v277
    %v463 = vunpack.c.l.b16 %v278
    %v464 = vunpack.c.h.b16 %v278
    %v465 = vunpack.c.l.b16 %v279
    %v466 = vunpack.c.h.b16 %v279
    %v467 = vunpack.c.l.b16 %v280
    %v468 = vunpack.c.h.b16 %v280
    %v469 = vunpack.c.l.b16 %v281
    %v470 = vunpack.c.h.b16 %v281
    %v471 = vunpack.c.l.b16 %v282
    %v472 = vunpack.c.h.b16 %v282
    %v473 = vunpack.c.l.b16 %v283
    %v474 = vunpack.c.h.b16 %v283
    %v475 = vunpack.c.l.b16 %v284
    %v476 = vunpack.c.h.b16 %v284
    %v477 = vunpack.c.l.b16 %v285
    %v478 = vunpack.c.h.b16 %v285
    %v479 = vunpack.c.l.b16 %v286
    %v480 = vunpack.c.h.b16 %v286
    %v481 = vunpack.c.l.b16 %v287
    %v482 = vunpack.c.h.b16 %v287
    %v483 = vunpack.c.l.b16 %v288
    %v484 = vunpack.c.h.b16 %v288
    %v485 = vunpack.c.l.b16 %v289
    %v486 = vunpack.c.h.b16 %v289
    %v487 = vunpack.c.l.b16 %v290
    %v488 = vunpack.c.h.b16 %v290
    %v489 = vunpack.c.l.b16 %v291
    %v490 = vunpack.c.h.b16 %v291
    %v491 = vunpack.c.l.b16 %v292
    %v492 = vunpack.c.h.b16 %v292
    %v493 = vunpack.c.l.b16 %v293
    %v494 = vunpack.c.h.b16 %v293
    %v495 = vunpack.c.l.b16 %v294
    %v496 = vunpack.c.h.b16 %v294
    %v497 = vunpack.c.l.b16 %v295
    %v498 = vunpack.c.h.b16 %v295
    %v499 = vunpack.c.l.b16 %v296
    %v500 = vunpack.c.h.b16 %v296
    %v501 = vunpack.c.l.b16 %v297
    %v502 = vunpack.c.h.b16 %v297
    %v503 = vpack.c.b16 %v377, %v375
    %v504 = vpack.c.b16 %v378, %v376
    %v505 = vpack.c.b16 %v381, %v379
    %v506 = vpack.c.b16 %v382, %v380
    %v507 = vpack.c.b16 %v385, %v383
    %v508 = vpack.c.b16 %v386, %v384
    %v509 = vpack.c.b16 %v389, %v387
    %v510 = vpack.c.b16 %v390, %v388
    %v511 = vpack.c.b16 %v393, %v391
    %v512 = vpack.c.b16 %v394, %v392
    %v513 = vpack.c.b16 %v397, %v395
    %v514 = vpack.c.b16 %v398, %v396
    %v515 = vpack.c.b16 %v401, %v399
    %v516 = vpack.c.b16 %v402, %v400
    %v517 = vpack.c.b16 %v405, %v403
    %v518 = vpack.c.b16 %v406, %v404
    %v519 = vpack.c.b16 %v409, %v407
    %v520 = vpack.c.b16 %v410, %v408
    %v521 = vpack.c.b16 %v413, %v411
    %v522 = vpack.c.b16 %v414, %v412
    %v523 = vpack.c.b16 %v417, %v415
    %v524 = vpack.c.b16 %v418, %v416
    %v525 = vpack.c.b16 %v421, %v419
    %v526 = vpack.c.b16 %v422, %v420
    %v527 = vpack.c.b16 %v425, %v423
    %v528 = vpack.c.b16 %v426, %v424
    %v529 = vpack.c.b16 %v429, %v427
    %v530 = vpack.c.b16 %v430, %v428
    %v531 = vpack.c.b16 %v433, %v431
    %v532 = vpack.c.b16 %v434, %v432
    %v533 = vpack.c.b16 %v437, %v435
    %v534 = vpack.c.b16 %v438, %v436
    %v535 = vpack.c.b16 %v441, %v439
    %v536 = vpack.c.b16 %v442, %v440
    %v537 = vpack.c.b16 %v445, %v443
    %v538 = vpack.c.b16 %v446, %v444
    %v539 = vpack.c.b16 %v449, %v447
    %v540 = vpack.c.b16 %v450, %v448
    %v541 = vpack.c.b16 %v453, %v451
    %v542 = vpack.c.b16 %v454, %v452
    %v543 = vpack.c.b16 %v457, %v455
    %v544 = vpack.c.b16 %v458, %v456
    %v545 = vpack.c.b16 %v461, %v459
    %v546 = vpack.c.b16 %v462, %v460
    %v547 = vpack.c.b16 %v465, %v463
    %v548 = vpack.c.b16 %v466, %v464
    %v549 = vpack.c.b16 %v469, %v467
    %v550 = vpack.c.b16 %v470, %v468
    %v551 = vpack.c.b16 %v473, %v471
    %v552 = vpack.c.b16 %v474, %v472
    %v553 = vpack.c.b16 %v477, %v475
    %v554 = vpack.c.b16 %v478, %v476
    %v555 = vpack.c.b16 %v481, %v479
    %v556 = vpack.c.b16 %v482, %v480
    %v557 = vpack.c.b16 %v485, %v483
    %v558 = vpack.c.b16 %v486, %v484
    %v559 = vpack.c.b16 %v489, %v487
    %v560 = vpack.c.b16 %v490, %v488
    %v561 = vpack.c.b16 %v493, %v491
    %v562 = vpack.c.b16 %v494, %v492
    %v563 = vpack.c.b16 %v497, %v495
    %v564 = vpack.c.b16 %v498, %v496
    %v565 = vpack.c.b16 %v501, %v499
    %v566 = vpack.c.b16 %v502, %v500
    %631 = vmatprep.subr.bf16.mxu0 %v504
    %632 = vmatpush1.bf16.msra.mxu0 %v503
    %633 = vmatprep.subr.bf16.mxu0 %v506
    %634 = vmatpush1.bf16.msra.mxu0 %v505
    %635 = vmatprep.subr.bf16.mxu0 %v508
    %636 = vmatpush1.bf16.msra.mxu0 %v507
    %637 = vmatprep.subr.bf16.mxu0 %v510
    %638 = vmatpush1.bf16.msra.mxu0 %v509
    %639 = vmatprep.subr.bf16.mxu0 %v512
    %640 = vmatpush1.bf16.msra.mxu0 %v511
    %641 = vmatprep.subr.bf16.mxu0 %v514
    %642 = vmatpush1.bf16.msra.mxu0 %v513
    %643 = vmatprep.subr.bf16.mxu0 %v516
    %644 = vmatpush1.bf16.msra.mxu0 %v515
    %645 = vmatprep.subr.bf16.mxu0 %v518
    %646 = vmatpush1.bf16.msra.mxu0 %v517
    %647 = vmatprep.subr.bf16.mxu0 %v520
    %648 = vmatpush1.bf16.msra.mxu0 %v519
    %649 = vmatprep.subr.bf16.mxu0 %v522
    %650 = vmatpush1.bf16.msra.mxu0 %v521
    %651 = vmatprep.subr.bf16.mxu0 %v524
    %652 = vmatpush1.bf16.msra.mxu0 %v523
    %653 = vmatprep.subr.bf16.mxu0 %v526
    %654 = vmatpush1.bf16.msra.mxu0 %v525
    %655 = vmatprep.subr.bf16.mxu0 %v528
    %656 = vmatpush1.bf16.msra.mxu0 %v527
    %657 = vmatprep.subr.bf16.mxu0 %v530
    %658 = vmatpush1.bf16.msra.mxu0 %v529
    %659 = vmatprep.subr.bf16.mxu0 %v532
    %660 = vmatpush1.bf16.msra.mxu0 %v531
    %661 = vmatprep.subr.bf16.mxu0 %v534
    %662 = vmatpush1.bf16.msra.mxu0 %v533
    %663 = vmatprep.mubr.bf16.mxu0 %v231
    %664 = vmatmul.mubr.bf16.gmra.mrb[0].mxu0 %v230
    %v665 = vpop.f32.mrb[0].mxu0
    %v666 = vadd.f32 %v304, %v665
    %v667 = vpop.f32.mrb[0].mxu0
    %v668 = vadd.f32 %v308, %v667
    %v669 = vpop.f32.mrb[0].mxu0
    %v670 = vadd.f32 %v304, %v669
    %v671 = vpop.f32.mrb[0].mxu0
    %v672 = vadd.f32 %v308, %v671
    %673 = vdwg.mxu0
    %674 = vmatprep.subr.bf16.mxu0 %v536
    %675 = vmatpush1.bf16.msra.mxu0 %v535
    %676 = vmatprep.subr.bf16.mxu0 %v538
    %677 = vmatpush1.bf16.msra.mxu0 %v537
    %678 = vmatprep.subr.bf16.mxu0 %v540
    %679 = vmatpush1.bf16.msra.mxu0 %v539
    %680 = vmatprep.subr.bf16.mxu0 %v542
    %681 = vmatpush1.bf16.msra.mxu0 %v541
    %682 = vmatprep.subr.bf16.mxu0 %v544
    %683 = vmatpush1.bf16.msra.mxu0 %v543
    %684 = vmatprep.subr.bf16.mxu0 %v546
    %685 = vmatpush1.bf16.msra.mxu0 %v545
    %686 = vmatprep.subr.bf16.mxu0 %v548
    %687 = vmatpush1.bf16.msra.mxu0 %v547
    %688 = vmatprep.subr.bf16.mxu0 %v550
    %689 = vmatpush1.bf16.msra.mxu0 %v549
    %690 = vmatprep.subr.bf16.mxu0 %v552
    %691 = vmatpush1.bf16.msra.mxu0 %v551
    %692 = vmatprep.subr.bf16.mxu0 %v554
    %693 = vmatpush1.bf16.msra.mxu0 %v553
    %694 = vmatprep.subr.bf16.mxu0 %v556
    %695 = vmatpush1.bf16.msra.mxu0 %v555
    %696 = vmatprep.subr.bf16.mxu0 %v558
    %697 = vmatpush1.bf16.msra.mxu0 %v557
    %698 = vmatprep.subr.bf16.mxu0 %v560
    %699 = vmatpush1.bf16.msra.mxu0 %v559
    %700 = vmatprep.subr.bf16.mxu0 %v562
    %701 = vmatpush1.bf16.msra.mxu0 %v561
    %702 = vmatprep.subr.bf16.mxu0 %v564
    %703 = vmatpush1.bf16.msra.mxu0 %v563
    %704 = vmatprep.subr.bf16.mxu0 %v566
    %705 = vmatpush1.bf16.msra.mxu0 %v565
    %706 = vmatprep.mubr.bf16.mxu0 %v233
    %707 = vmatmul.mubr.bf16.gmra.mrb[0].mxu0 %v232
    %v708 = vpop.f32.mrb[0].mxu0
    %v709 = vadd.f32 %v666, %v708
    %v710 = vpop.f32.mrb[0].mxu0
    %v711 = vadd.f32 %v668, %v710
    %v712 = vpop.f32.mrb[0].mxu0
    %v713 = vadd.f32 %v670, %v712
    %v714 = vpop.f32.mrb[0].mxu0
    %v715 = vadd.f32 %v672, %v714
    %716 = vdwg.mxu0
    %v717 = vmax.f32 %v709, 0.0
    %v718 = vmax.f32 %v711, 0.0
    %v719 = vmax.f32 %v713, 0.0
    %v720 = vmax.f32 %v715, 0.0
    %v721 = vpack.c.bf16 %v719, %v717
    %v722 = vpack.c.bf16 %v720, %v718
    %v723 = vld [vmem:[#allocation5 + $0x440] sm:$0xf]
    %v724 = vld [vmem:[#allocation5 + $0x450] sm:$0xf]
    %v725 = vld [vmem:[#allocation5 + $0x460] sm:$0xf]
    %v726 = vld [vmem:[#allocation5 + $0x470] sm:$0xf]
    %v727 = vld [vmem:[#allocation5 + $0x480] sm:$0xf]
    %v728 = vld [vmem:[#allocation5 + $0x490] sm:$0xf]
    %v729 = vld [vmem:[#allocation5 + $0x4a0] sm:$0xf]
    %v730 = vld [vmem:[#allocation5 + $0x4b0] sm:$0xf]
    %v731 = vld [vmem:[#allocation5 + $0x4c0] sm:$0xf]
    %v732 = vld [vmem:[#allocation5 + $0x4d0] sm:$0xf]
    %v733 = vld [vmem:[#allocation5 + $0x4e0] sm:$0xf]
    %v734 = vld [vmem:[#allocation5 + $0x4f0] sm:$0xf]
    %v735 = vld [vmem:[#allocation5 + $0x500] sm:$0xf]
    %v736 = vld [vmem:[#allocation5 + $0x510] sm:$0xf]
    %v737 = vld [vmem:[#allocation5 + $0x520] sm:$0xf]
    %v738 = vld [vmem:[#allocation5 + $0x530] sm:$0xf]
    %v739 = vld [vmem:[#allocation5 + $0x540] sm:$0xf]
    %v740 = vld [vmem:[#allocation5 + $0x550] sm:$0xf]
    %v741 = vld [vmem:[#allocation5 + $0x560] sm:$0xf]
    %v742 = vld [vmem:[#allocation5 + $0x570] sm:$0xf]
    %v743 = vld [vmem:[#allocation5 + $0x580] sm:$0xf]
    %v744 = vld [vmem:[#allocation5 + $0x590] sm:$0xf]
    %v745 = vld [vmem:[#allocation5 + $0x5a0] sm:$0xf]
    %v746 = vld [vmem:[#allocation5 + $0x5b0] sm:$0xf]
    %v747 = vld [vmem:[#allocation5 + $0x5c0] sm:$0xf]
    %v748 = vld [vmem:[#allocation5 + $0x5d0] sm:$0xf]
    %v749 = vld [vmem:[#allocation5 + $0x5e0] sm:$0xf]
    %v750 = vld [vmem:[#allocation5 + $0x5f0] sm:$0xf]
    %v751 = vld [vmem:[#allocation5 + $0x600] sm:$0xf]
    %v752 = vld [vmem:[#allocation5 + $0x610] sm:$0xf]
    %v753 = vld [vmem:[#allocation5 + $0x620] sm:$0xf]
    %v754 = vld [vmem:[#allocation5 + $0x630] sm:$0xf]
    %v755 = vld [vmem:[#allocation7 + $0x2] ss:$0 sm:$0xff]
    %v788 = vunpack.c.l.b16 %v723
    %v789 = vunpack.c.l.b16 %v724
    %v790 = vunpack.c.l.b16 %v725
    %v791 = vunpack.c.l.b16 %v726
    %v792 = vunpack.c.l.b16 %v727
    %v793 = vunpack.c.l.b16 %v728
    %v794 = vunpack.c.l.b16 %v729
    %v795 = vunpack.c.l.b16 %v730
    %v796 = vunpack.c.l.b16 %v731
    %v797 = vunpack.c.l.b16 %v732
    %v798 = vunpack.c.l.b16 %v733
    %v799 = vunpack.c.l.b16 %v734
    %v800 = vunpack.c.l.b16 %v735
    %v801 = vunpack.c.l.b16 %v736
    %v802 = vunpack.c.l.b16 %v737
    %v803 = vunpack.c.l.b16 %v738
    %v804 = vunpack.c.l.b16 %v739
    %v805 = vunpack.c.l.b16 %v740
    %v806 = vunpack.c.l.b16 %v741
    %v807 = vunpack.c.l.b16 %v742
    %v808 = vunpack.c.l.b16 %v743
    %v809 = vunpack.c.l.b16 %v744
    %v810 = vunpack.c.l.b16 %v745
    %v811 = vunpack.c.l.b16 %v746
    %v812 = vunpack.c.l.b16 %v747
    %v813 = vunpack.c.l.b16 %v748
    %v814 = vunpack.c.l.b16 %v749
    %v815 = vunpack.c.l.b16 %v750
    %v816 = vunpack.c.l.b16 %v751
    %v817 = vunpack.c.l.b16 %v752
    %v818 = vunpack.c.l.b16 %v753
    %v819 = vunpack.c.l.b16 %v754
    %v820 = vpack.c.b16 %v789, %v788
    %v821 = vpack.c.b16 %v791, %v790
    %v822 = vpack.c.b16 %v793, %v792
    %v823 = vpack.c.b16 %v795, %v794
    %v824 = vpack.c.b16 %v797, %v796
    %v825 = vpack.c.b16 %v799, %v798
    %v826 = vpack.c.b16 %v801, %v800
    %v827 = vpack.c.b16 %v803, %v802
    %v828 = vpack.c.b16 %v805, %v804
    %v829 = vpack.c.b16 %v807, %v806
    %v830 = vpack.c.b16 %v809, %v808
    %v831 = vpack.c.b16 %v811, %v810
    %v832 = vpack.c.b16 %v813, %v812
    %v833 = vpack.c.b16 %v815, %v814
    %v834 = vpack.c.b16 %v817, %v816
    %v835 = vpack.c.b16 %v819, %v818
    %852 = vmatprep.subr.bf16.mxu0 0
    %853 = vmatpush1.bf16.msra.mxu0 %v820
    %854 = vmatprep.subr.bf16.mxu0 0
    %855 = vmatpush1.bf16.msra.mxu0 %v821
    %856 = vmatprep.subr.bf16.mxu0 0
    %857 = vmatpush1.bf16.msra.mxu0 %v822
    %858 = vmatprep.subr.bf16.mxu0 0
    %859 = vmatpush1.bf16.msra.mxu0 %v823
    %860 = vmatprep.subr.bf16.mxu0 0
    %861 = vmatpush1.bf16.msra.mxu0 %v824
    %862 = vmatprep.subr.bf16.mxu0 0
    %863 = vmatpush1.bf16.msra.mxu0 %v825
    %864 = vmatprep.subr.bf16.mxu0 0
    %865 = vmatpush1.bf16.msra.mxu0 %v826
    %866 = vmatprep.subr.bf16.mxu0 0
    %867 = vmatpush1.bf16.msra.mxu0 %v827
    %868 = vmatprep.subr.bf16.mxu0 0
    %869 = vmatpush1.bf16.msra.mxu0 %v828
    %870 = vmatprep.subr.bf16.mxu0 0
    %871 = vmatpush1.bf16.msra.mxu0 %v829
    %872 = vmatprep.subr.bf16.mxu0 0
    %873 = vmatpush1.bf16.msra.mxu0 %v830
    %874 = vmatprep.subr.bf16.mxu0 0
    %875 = vmatpush1.bf16.msra.mxu0 %v831
    %876 = vmatprep.subr.bf16.mxu0 0
    %877 = vmatpush1.bf16.msra.mxu0 %v832
    %878 = vmatprep.subr.bf16.mxu0 0
    %879 = vmatpush1.bf16.msra.mxu0 %v833
    %880 = vmatprep.subr.bf16.mxu0 0
    %881 = vmatpush1.bf16.msra.mxu0 %v834
    %882 = vmatprep.subr.bf16.mxu0 0
    %883 = vmatpush1.bf16.msra.mxu0 %v835
    %884 = vmatprep.mubr.bf16.mxu0 %v722
    %885 = vmatmul.mubr.bf16.gmra.mrb[0].mxu0 %v721
    %v886 = vpop.f32.mrb[0].mxu0
    %v887 = vadd.f32 %v755, %v886
    %v888 = vpop.f32.mrb[0].mxu0
    %v889 = vpop.f32.mrb[0].mxu0
    %v890 = vadd.f32 %v755, %v889
    %v891 = vpop.f32.mrb[0].mxu0
    %892 = vdwg.mxu0
    %v893 = vmax.f32 %v887, 0.0
    %v894 = vmax.f32 %v890, 0.0
    %v895 = vpack.c.bf16 %v894, %v893
    %v896 = vld [vmem:[#allocation5 + $0x640] sm:$0xf]
    %v897 = vld [vmem:[#allocation5 + $0x650] sm:$0xf]
    %v898 = vld [vmem:[#allocation5 + $0x660] sm:$0xf]
    %v899 = vld [vmem:[#allocation5 + $0x670] sm:$0xf]
    %v900 = vld [vmem:[#allocation5 + $0x680] sm:$0xf]
    %v901 = vld [vmem:[#allocation5 + $0x690] sm:$0xf]
    %v902 = vld [vmem:[#allocation5 + $0x6a0] sm:$0xf]
    %v903 = vld [vmem:[#allocation5 + $0x6b0] sm:$0xf]
    %v904 = vld [vmem:[#allocation5 + $0x6c0] sm:$0xf]
    %v905 = vld [vmem:[#allocation5 + $0x6d0] sm:$0xf]
    %v906 = vld [vmem:[#allocation5 + $0x6e0] sm:$0xf]
    %v907 = vld [vmem:[#allocation5 + $0x6f0] sm:$0xf]
    %v908 = vld [vmem:[#allocation5 + $0x700] sm:$0xf]
    %v909 = vld [vmem:[#allocation5 + $0x710] sm:$0xf]
    %v910 = vld [vmem:[#allocation5 + $0x720] sm:$0xf]
    %v911 = vld [vmem:[#allocation5 + $0x730] sm:$0xf]
    %v912 = vld [vmem:[#allocation7 + $0x3] ss:$0 sm:$0xff]
    %v929 = vunpack.c.l.b16 %v896
    %v930 = vunpack.c.l.b16 %v897
    %v931 = vunpack.c.l.b16 %v898
    %v932 = vunpack.c.l.b16 %v899
    %v933 = vunpack.c.l.b16 %v900
    %v934 = vunpack.c.l.b16 %v901
    %v935 = vunpack.c.l.b16 %v902
    %v936 = vunpack.c.l.b16 %v903
    %v937 = vunpack.c.l.b16 %v904
    %v938 = vunpack.c.l.b16 %v905
    %v939 = vunpack.c.l.b16 %v906
    %v940 = vunpack.c.l.b16 %v907
    %v941 = vunpack.c.l.b16 %v908
    %v942 = vunpack.c.l.b16 %v909
    %v943 = vunpack.c.l.b16 %v910
    %v944 = vunpack.c.l.b16 %v911
    %v945 = vpack.c.b16 %v930, %v929
    %v946 = vpack.c.b16 %v932, %v931
    %v947 = vpack.c.b16 %v934, %v933
    %v948 = vpack.c.b16 %v936, %v935
    %v949 = vpack.c.b16 %v938, %v937
    %v950 = vpack.c.b16 %v940, %v939
    %v951 = vpack.c.b16 %v942, %v941
    %v952 = vpack.c.b16 %v944, %v943
    %961 = vmatprep.subr.bf16.mxu0 0
    %962 = vmatpush1.bf16.msra.mxu0 %v945
    %963 = vmatprep.subr.bf16.mxu0 0
    %964 = vmatpush1.bf16.msra.mxu0 %v946
    %965 = vmatprep.subr.bf16.mxu0 0
    %966 = vmatpush1.bf16.msra.mxu0 %v947
    %967 = vmatprep.subr.bf16.mxu0 0
    %968 = vmatpush1.bf16.msra.mxu0 %v948
    %969 = vmatprep.subr.bf16.mxu0 0
    %970 = vmatpush1.bf16.msra.mxu0 %v949
    %971 = vmatprep.subr.bf16.mxu0 0
    %972 = vmatpush1.bf16.msra.mxu0 %v950
    %973 = vmatprep.subr.bf16.mxu0 0
    %974 = vmatpush1.bf16.msra.mxu0 %v951
    %975 = vmatprep.subr.bf16.mxu0 0
    %976 = vmatpush1.bf16.msra.mxu0 %v952
    %977 = vmatprep.subr.bf16.mxu0 0
    %978 = vmatpush1.bf16.msra.mxu0 0
    %979 = vmatprep.subr.bf16.mxu0 0
    %980 = vmatpush1.bf16.msra.mxu0 0
    %981 = vmatprep.subr.bf16.mxu0 0
    %982 = vmatpush1.bf16.msra.mxu0 0
    %983 = vmatprep.subr.bf16.mxu0 0
    %984 = vmatpush1.bf16.msra.mxu0 0
    %985 = vmatprep.subr.bf16.mxu0 0
    %986 = vmatpush1.bf16.msra.mxu0 0
    %987 = vmatprep.subr.bf16.mxu0 0
    %988 = vmatpush1.bf16.msra.mxu0 0
    %989 = vmatprep.subr.bf16.mxu0 0
    %990 = vmatpush1.bf16.msra.mxu0 0
    %991 = vmatprep.subr.bf16.mxu0 0
    %992 = vmatpush1.bf16.msra.mxu0 0
    %993 = vmatprep.mubr.bf16.mxu0 0
    %994 = vmatmul.mubr.bf16.gmra.mrb[0].mxu0 %v895
    %v995 = vpop.f32.mrb[0].mxu0
    %v996 = vadd.f32 %v912, %v995
    %v997 = vpop.f32.mrb[0].mxu0
    %v998 = vpop.f32.mrb[0].mxu0
    %v999 = vadd.f32 %v912, %v998
    %v1000 = vpop.f32.mrb[0].mxu0
    %1001 = vdwg.mxu0
    %v1002 = vmax.f32 %v996, 0.0
    %v1003 = vmax.f32 %v999, 0.0
    %v1004 = vpack.c.bf16 %v1003, %v1002
    %v1005 = vld [vmem:[#allocation5 + $0x740] sm:$0xf]
    %v1006 = vld [vmem:[#allocation5 + $0x750] sm:$0xf]
    %v1007 = vld [vmem:[#allocation5 + $0x760] sm:$0xf]
    %v1008 = vld [vmem:[#allocation5 + $0x770] sm:$0xf]
    %v1009 = vld [vmem:[#allocation5 + $0x780] sm:$0xf]
    %v1010 = vld [vmem:[#allocation5 + $0x790] sm:$0xf]
    %v1011 = vld [vmem:[#allocation5 + $0x7a0] sm:$0xf]
    %v1012 = vld [vmem:[#allocation5 + $0x7b0] sm:$0xf]
    %v1013 = vld [vmem:[#allocation5 + $0x7c0] sm:$0xf]
    %v1014 = vld [vmem:[#allocation5 + $0x7d0] sm:$0xf]
    %v1015 = vld [vmem:[#allocation5 + $0x7e0] sm:$0xf]
    %v1016 = vld [vmem:[#allocation5 + $0x7f0] sm:$0xf]
    %v1017 = vld [vmem:[#allocation5 + $0x800] sm:$0xf]
    %v1018 = vld [vmem:[#allocation5 + $0x810] sm:$0xf]
    %v1019 = vld [vmem:[#allocation5 + $0x820] sm:$0xf]
    %v1020 = vld [vmem:[#allocation5 + $0x830] sm:$0xf]
    %v1021 = vld [vmem:[#allocation7 + $0x4] ss:$0 sm:$0xff]
    %v1038 = vunpack.c.l.b16 %v1005
    %v1039 = vunpack.c.l.b16 %v1006
    %v1040 = vunpack.c.l.b16 %v1007
    %v1041 = vunpack.c.l.b16 %v1008
    %v1042 = vunpack.c.l.b16 %v1009
    %v1043 = vunpack.c.l.b16 %v1010
    %v1044 = vunpack.c.l.b16 %v1011
    %v1045 = vunpack.c.l.b16 %v1012
    %v1046 = vunpack.c.l.b16 %v1013
    %v1047 = vunpack.c.l.b16 %v1014
    %v1048 = vunpack.c.l.b16 %v1015
    %v1049 = vunpack.c.l.b16 %v1016
    %v1050 = vunpack.c.l.b16 %v1017
    %v1051 = vunpack.c.l.b16 %v1018
    %v1052 = vunpack.c.l.b16 %v1019
    %v1053 = vunpack.c.l.b16 %v1020
    %v1054 = vpack.c.b16 %v1039, %v1038
    %v1055 = vpack.c.b16 %v1041, %v1040
    %v1056 = vpack.c.b16 %v1043, %v1042
    %v1057 = vpack.c.b16 %v1045, %v1044
    %v1058 = vpack.c.b16 %v1047, %v1046
    %v1059 = vpack.c.b16 %v1049, %v1048
    %v1060 = vpack.c.b16 %v1051, %v1050
    %v1061 = vpack.c.b16 %v1053, %v1052
    %1070 = vmatprep.subr.bf16.mxu0 0
    %1071 = vmatpush1.bf16.msra.mxu0 %v1054
    %1072 = vmatprep.subr.bf16.mxu0 0
    %1073 = vmatpush1.bf16.msra.mxu0 %v1055
    %1074 = vmatprep.subr.bf16.mxu0 0
    %1075 = vmatpush1.bf16.msra.mxu0 %v1056
    %1076 = vmatprep.subr.bf16.mxu0 0
    %1077 = vmatpush1.bf16.msra.mxu0 %v1057
    %1078 = vmatprep.subr.bf16.mxu0 0
    %1079 = vmatpush1.bf16.msra.mxu0 %v1058
    %1080 = vmatprep.subr.bf16.mxu0 0
    %1081 = vmatpush1.bf16.msra.mxu0 %v1059
    %1082 = vmatprep.subr.bf16.mxu0 0
    %1083 = vmatpush1.bf16.msra.mxu0 %v1060
    %1084 = vmatprep.subr.bf16.mxu0 0
    %1085 = vmatpush1.bf16.msra.mxu0 %v1061
    %1086 = vmatprep.subr.bf16.mxu0 0
    %1087 = vmatpush1.bf16.msra.mxu0 0
    %1088 = vmatprep.subr.bf16.mxu0 0
    %1089 = vmatpush1.bf16.msra.mxu0 0
    %1090 = vmatprep.subr.bf16.mxu0 0
    %1091 = vmatpush1.bf16.msra.mxu0 0
    %1092 = vmatprep.subr.bf16.mxu0 0
    %1093 = vmatpush1.bf16.msra.mxu0 0
    %1094 = vmatprep.subr.bf16.mxu0 0
    %1095 = vmatpush1.bf16.msra.mxu0 0
    %1096 = vmatprep.subr.bf16.mxu0 0
    %1097 = vmatpush1.bf16.msra.mxu0 0
    %1098 = vmatprep.subr.bf16.mxu0 0
    %1099 = vmatpush1.bf16.msra.mxu0 0
    %1100 = vmatprep.subr.bf16.mxu0 0
    %1101 = vmatpush1.bf16.msra.mxu0 0
    %1102 = vmatprep.mubr.bf16.mxu0 0
    %1103 = vmatmul.mubr.bf16.gmra.mrb[0].mxu0 %v1004
    %v1104 = vpop.f32.mrb[0].mxu0
    %v1105 = vadd.f32 %v1021, %v1104
    %v1106 = vpop.f32.mrb[0].mxu0
    %v1107 = vpop.f32.mrb[0].mxu0
    %v1108 = vadd.f32 %v1021, %v1107
    %v1109 = vpop.f32.mrb[0].mxu0
    %1110 = vdwg.mxu0
    %v1111 = vmax.f32 %v1105, 0.0
    %v1112 = vmax.f32 %v1108, 0.0
    %v1113 = vpack.c.bf16 %v1112, %v1111
    %v1114 = vld [vmem:[#allocation5 + $0x840] sm:$0xf]
    %v1115 = vld [vmem:[#allocation5 + $0x850] sm:$0xf]
    %v1116 = vld [vmem:[#allocation5 + $0x860] sm:$0xf]
    %v1117 = vld [vmem:[#allocation5 + $0x870] sm:$0xf]
    %v1118 = vld [vmem:[#allocation5 + $0x880] sm:$0xf]
    %v1119 = vld [vmem:[#allocation5 + $0x890] sm:$0xf]
    %v1120 = vld [vmem:[#allocation5 + $0x8a0] sm:$0xf]
    %v1121 = vld [vmem:[#allocation5 + $0x8b0] sm:$0xf]
    %v1122 = vld [vmem:[#allocation5 + $0x8c0] sm:$0xf]
    %v1123 = vld [vmem:[#allocation5 + $0x8d0] sm:$0xf]
    %v1124 = vld [vmem:[#allocation5 + $0x8e0] sm:$0xf]
    %v1125 = vld [vmem:[#allocation5 + $0x8f0] sm:$0xf]
    %v1126 = vld [vmem:[#allocation5 + $0x900] sm:$0xf]
    %v1127 = vld [vmem:[#allocation5 + $0x910] sm:$0xf]
    %v1128 = vld [vmem:[#allocation5 + $0x920] sm:$0xf]
    %v1129 = vld [vmem:[#allocation5 + $0x930] sm:$0xf]
    %v1130 = vld [vmem:[#allocation7 + $0x5] ss:$0 sm:$0xff]
    %v1147 = vunpack.c.l.b16 %v1114
    %v1148 = vunpack.c.l.b16 %v1115
    %v1149 = vunpack.c.l.b16 %v1116
    %v1150 = vunpack.c.l.b16 %v1117
    %v1151 = vunpack.c.l.b16 %v1118
    %v1152 = vunpack.c.l.b16 %v1119
    %v1153 = vunpack.c.l.b16 %v1120
    %v1154 = vunpack.c.l.b16 %v1121
    %v1155 = vunpack.c.l.b16 %v1122
    %v1156 = vunpack.c.l.b16 %v1123
    %v1157 = vunpack.c.l.b16 %v1124
    %v1158 = vunpack.c.l.b16 %v1125
    %v1159 = vunpack.c.l.b16 %v1126
    %v1160 = vunpack.c.l.b16 %v1127
    %v1161 = vunpack.c.l.b16 %v1128
    %v1162 = vunpack.c.l.b16 %v1129
    %v1163 = vpack.c.b16 %v1148, %v1147
    %v1164 = vpack.c.b16 %v1150, %v1149
    %v1165 = vpack.c.b16 %v1152, %v1151
    %v1166 = vpack.c.b16 %v1154, %v1153
    %v1167 = vpack.c.b16 %v1156, %v1155
    %v1168 = vpack.c.b16 %v1158, %v1157
    %v1169 = vpack.c.b16 %v1160, %v1159
    %v1170 = vpack.c.b16 %v1162, %v1161
    %1179 = vmatprep.subr.bf16.mxu0 0
    %1180 = vmatpush1.bf16.msra.mxu0 %v1163
    %1181 = vmatprep.subr.bf16.mxu0 0
    %1182 = vmatpush1.bf16.msra.mxu0 %v1164
    %1183 = vmatprep.subr.bf16.mxu0 0
    %1184 = vmatpush1.bf16.msra.mxu0 %v1165
    %1185 = vmatprep.subr.bf16.mxu0 0
    %1186 = vmatpush1.bf16.msra.mxu0 %v1166
    %1187 = vmatprep.subr.bf16.mxu0 0
    %1188 = vmatpush1.bf16.msra.mxu0 %v1167
    %1189 = vmatprep.subr.bf16.mxu0 0
    %1190 = vmatpush1.bf16.msra.mxu0 %v1168
    %1191 = vmatprep.subr.bf16.mxu0 0
    %1192 = vmatpush1.bf16.msra.mxu0 %v1169
    %1193 = vmatprep.subr.bf16.mxu0 0
    %1194 = vmatpush1.bf16.msra.mxu0 %v1170
    %1195 = vmatprep.subr.bf16.mxu0 0
    %1196 = vmatpush1.bf16.msra.mxu0 0
    %1197 = vmatprep.subr.bf16.mxu0 0
    %1198 = vmatpush1.bf16.msra.mxu0 0
    %1199 = vmatprep.subr.bf16.mxu0 0
    %1200 = vmatpush1.bf16.msra.mxu0 0
    %1201 = vmatprep.subr.bf16.mxu0 0
    %1202 = vmatpush1.bf16.msra.mxu0 0
    %1203 = vmatprep.subr.bf16.mxu0 0
    %1204 = vmatpush1.bf16.msra.mxu0 0
    %1205 = vmatprep.subr.bf16.mxu0 0
    %1206 = vmatpush1.bf16.msra.mxu0 0
    %1207 = vmatprep.subr.bf16.mxu0 0
    %1208 = vmatpush1.bf16.msra.mxu0 0
    %1209 = vmatprep.subr.bf16.mxu0 0
    %1210 = vmatpush1.bf16.msra.mxu0 0
    %1211 = vmatprep.mubr.bf16.mxu0 0
    %1212 = vmatmul.mubr.bf16.gmra.mrb[0].mxu0 %v1113
    %v1213 = vpop.f32.mrb[0].mxu0
    %v1214 = vadd.f32 %v1130, %v1213
    %v1215 = vpop.f32.mrb[0].mxu0
    %v1216 = vpop.f32.mrb[0].mxu0
    %v1217 = vadd.f32 %v1130, %v1216
    %v1218 = vpop.f32.mrb[0].mxu0
    %1219 = vdwg.mxu0
    %v1220 = vlaneseq
    %v1221 = vand.u32 %v1220, 127
    %vm1222 = vcmp.lt.s32.totalorder %v1221, 5
    %v1223 = vsel %vm1222, %v1214, -1e+30
    %v1224 = vsel %vm1222, %v1217, -1e+30
    %1225 = vmax.xlane.f32.xlu0 %v1223
    %v1226 = vpop.xlane.xlu0 %1225
    %1227 = vmax.xlane.f32.xlu0 %v1224
    %v1228 = vpop.xlane.xlu0 %1227
    %v1229 = vsub.f32 %v1223, %v1226
    %v1230 = vsub.f32 %v1224, %v1228
    %v1231 = vmul.f32 %v1229, 1.442695
    %v1232 = vpow.pop %v1231
    %v1233 = vmul.f32 %v1230, 1.442695
    %v1234 = vpow.pop %v1233
    %1235 = vadd.xlane.f32.xlu0 %v1232
    %v1236 = vpop.xlane.xlu0 %1235
    %1237 = vadd.xlane.f32.xlu0 %v1234
    %v1238 = vpop.xlane.xlu0 %1237
    %v1239 = vrcp.pop %v1236
    %v1240 = vmul.f32 %v1232, %v1239
    %v1241 = vrcp.pop %v1238
    %v1242 = vmul.f32 %v1234, %v1241
    %1243 = vst [vmem:[#allocation8] sm:$0xff] %v1240
    %1244 = vst [vmem:[#allocation8 + $0x8] sm:$0xff] %v1242
    // Predicated region
    $region26: #{tpu_custom_call.1} parent=1 // pred_check
      _
    $region27: #{tpu_custom_call.1} parent=1 // pred_check_branch
      %1246 = sbr.rel (0) target = $region29
    $region28: #{tpu_custom_call.1} parent=1 // pred_region
      %s1248 = ssub.s32 256, 256
      %1249 = vsyncadd [#allocation4], %s1248
      %s1250 = sshll.u32 [#allocation8], 4
      %s1251 = int_to_ptr.vmem [resolvable:$true] %s1250
      %1256 = dma.vmem_to_hbm [thread:$0]  %s1251, 256, %s3, [#allocation4], 128, 128, 8
    $region29: #{tpu_custom_call.1} parent=1 // pred_fallthru
      _
    // Predicated region
    $region30: #{tpu_custom_call.1} parent=1 // pred_check
      _
    $region31: #{tpu_custom_call.1} parent=1 // pred_check_branch
      %1258 = sbr.rel (0) target = $region33
    $region32: #{tpu_custom_call.1} parent=1 // pred_region
      %1259 = dma.done [#allocation4], 256
    $region33: #{tpu_custom_call.1} parent=1 // pred_fallthru
      _
    %1260 = vsyncpa [#allocation3], 1
    %1261 = vsyncpa [#allocation6], 1
    %1262 = vsyncpa [#allocation4], 1

</llo_original>
